<compile_context>
chip_gen: v7x
topology: tpu7x:2x2x1
jax: 0.10.0
libtpu: 0.0.40
codegen_flags: <defaults>
</compile_context>

<pallas_src>
import jax
import jax.numpy as jnp
from jax import lax
from jax.experimental import pallas as pl
from jax.experimental.pallas import tpu as pltpu


def _elu(x):
    # alpha = 1.0; clamp arg of exp so the unselected branch stays finite.
    return jnp.where(x > 0, x, jnp.exp(jnp.minimum(x, 0.0)) - 1.0)


def _conv1d_same(h, w_ref, b_ref, keep_l, keep_r):
    """k=3, s=1, p=1 conv in channels-first layout.

    h:       (Cin, N) f32 activations, N = block_b * L on the lane axis
    w_ref:   (3, Cout, Cin) ref, w_ref[k][co][ci] == W_torch[co, ci, k] (BN folded)
    b_ref:   (Cout, 1) ref (BN folded)
    keep_l:  (1, N) f32, 0.0 at columns whose left neighbour crosses a
             sequence boundary (pos-in-seq == 0), 1.0 elsewhere
    keep_r:  (1, N) f32, 0.0 at pos-in-seq == L-1, 1.0 elsewhere
    """
    n = h.shape[1]
    # Tap k=0 reads x[l-1]: rotate right by 1, zero the wrapped/boundary cols.
    h_m1 = pltpu.roll(h, 1, 1) * keep_l
    # Tap k=2 reads x[l+1]: rotate left by 1 (== rotate right by n-1).
    h_p1 = pltpu.roll(h, n - 1, 1) * keep_r
    y = jnp.dot(w_ref[1], h, preferred_element_type=jnp.float32)
    y = y + jnp.dot(w_ref[0], h_m1, preferred_element_type=jnp.float32)
    y = y + jnp.dot(w_ref[2], h_p1, preferred_element_type=jnp.float32)
    return y + b_ref[...]                                   # (Cout, N)


def cnn_block_kernel(x_ref, ml_ref, mr_ref,
                     w1_ref, b1_ref, w2_ref, b2_ref, w3_ref, b3_ref,
                     o_ref):
    x = x_ref[...].astype(jnp.float32)                      # (Cin, N)
    keep_l = ml_ref[...]                                    # (1, N)
    keep_r = mr_ref[...]                                    # (1, N)

    h = _elu(_conv1d_same(x, w1_ref, b1_ref, keep_l, keep_r))   # conv1+bn1+ELU
    # Dropout(p=0.5): identity in eval mode.
    h = _elu(_conv1d_same(h, w2_ref, b2_ref, keep_l, keep_r))   # conv2+bn1+ELU
    h = _conv1d_same(h, w3_ref, b3_ref, keep_l, keep_r)         # conv3+bn2

    o_ref[...] = (h + x).astype(o_ref.dtype)                # residual add


def _pick_block_cols(B, L, Cin, Cout, budget_bytes):
    """Columns (== whole batch elements * L) per grid step, sized vs VMEM."""
    per_col = 4 * (8 * Cin + 10 * Cout)       # rough live f32 bytes per column
    max_cols = max(L, budget_bytes // per_col)
    # Prefer lane blocks that are the full array or a multiple of 128.
    for d in range(B, 0, -1):
        if B % d == 0:
            cols = d * L
            if cols <= max_cols and (d == B or cols % 128 == 0):
                return cols
    for d in range(B, 0, -1):
        if B % d == 0 and d * L <= max_cols:
            return d * L
    return L


def cnn_block_pallas(x, params, *, block_cols=None, vmem_budget_bytes=8 << 20):
    """x: (B, L, Cin) float32; params from make_params (BN already folded)."""
    B, L, Cin = x.shape
    Cout = params["b1"].shape[0]
    N = B * L

    # Wrapper-side layout plumbing (done by XLA outside the kernel):
    # (B, L, C) -> (C, B*L) so the long axis sits on lanes.
    x2 = jnp.transpose(x, (0, 2, 1))          # (B, C, L)
    x2 = jnp.transpose(x2, (1, 0, 2)).reshape(Cin, N)

    if block_cols is None:
        block_cols = _pick_block_cols(B, L, Cin, Cout, vmem_budget_bytes)
    assert block_cols % L == 0 and N % block_cols == 0, \
        "block must cover whole batch elements and divide B*L"

    # Sequence-boundary masks.  Blocks always start at a batch-element
    # boundary, so position-in-sequence == column % L for every grid step and
    # the masks are grid-invariant (stay resident like the weights).
    pos = jnp.arange(block_cols, dtype=jnp.int32) % L
    keep_l = (pos != 0).astype(jnp.float32).reshape(1, block_cols)
    keep_r = (pos != (L - 1)).astype(jnp.float32).reshape(1, block_cols)

    grid = (N // block_cols,)

    def resident(shape):
        nd = len(shape)
        return pl.BlockSpec(shape, lambda j: (0,) * nd)

    flops = 2 * N * 3 * (Cin * Cout + Cout * Cout + Cout * Cin)
    bytes_accessed = 4 * (2 * N * Cin
                          + 3 * (Cin * Cout + Cout * Cout + Cout * Cin)
                          + 2 * Cout + Cin + 2 * block_cols)

    out2 = pl.pallas_call(
        cnn_block_kernel,
        out_shape=jax.ShapeDtypeStruct((Cin, N), x.dtype),
        grid_spec=pltpu.PrefetchScalarGridSpec(
            num_scalar_prefetch=0,
            grid=grid,
            in_specs=[
                pl.BlockSpec((Cin, block_cols), lambda j: (0, j)),   # x (lane-dense)
                resident((1, block_cols)),                           # keep_left
                resident((1, block_cols)),                           # keep_right
                resident((3, Cout, Cin)), resident((Cout, 1)),       # conv1 (bn1 folded)
                resident((3, Cout, Cout)), resident((Cout, 1)),      # conv2 (bn1 folded)
                resident((3, Cin, Cout)), resident((Cin, 1)),        # conv3 (bn2 folded)
            ],
            out_specs=pl.BlockSpec((Cin, block_cols), lambda j: (0, j)),
        ),
        compiler_params=pltpu.CompilerParams(
            dimension_semantics=("parallel",)),
        cost_estimate=pl.CostEstimate(
            flops=flops,
            transcendentals=2 * N * Cout,
            bytes_accessed=bytes_accessed),
    )(x2, keep_l, keep_r,
      params["w1"], params["b1"],
      params["w2"], params["b2"],
      params["w3"], params["b3"])

    # (Cin, B*L) -> (B, L, Cin)
    return jnp.transpose(out2.reshape(Cin, B, L), (1, 2, 0))


# ----------------------------------------------------------------------------
# Deterministic parameter construction (BN folded into conv weights) + a
# pure-JAX reference of the PyTorch module (eval mode) for verification.
# ----------------------------------------------------------------------------
def make_params(key, input_size, output_size, eps=1e-5):
    ks = jax.random.split(key, 12)
    f32 = jnp.float32

    # PyTorch Conv1d weight layout: (Cout, Cin, K)
    W1 = 0.1 * jax.random.normal(ks[0], (output_size, input_size, 3), f32)
    b1 = 0.1 * jax.random.normal(ks[1], (output_size,), f32)
    W2 = 0.1 * jax.random.normal(ks[2], (output_size, output_size, 3), f32)
    b2 = 0.1 * jax.random.normal(ks[3], (output_size,), f32)
    W3 = 0.1 * jax.random.normal(ks[4], (input_size, output_size, 3), f32)
    b3 = 0.1 * jax.random.normal(ks[5], (input_size,), f32)

    # BatchNorm1d(output_size) and BatchNorm1d(input_size) eval statistics.
    g1 = 1.0 + 0.1 * jax.random.normal(ks[6], (output_size,), f32)
    be1 = 0.1 * jax.random.normal(ks[7], (output_size,), f32)
    m1 = 0.05 * jax.random.normal(ks[8], (output_size,), f32)
    v1 = 1.0 + 0.1 * jnp.abs(jax.random.normal(ks[9], (output_size,), f32))

    g2 = 1.0 + 0.1 * jax.random.normal(ks[10], (input_size,), f32)
    be2 = 0.05 * jax.random.normal(ks[11], (input_size,), f32)
    m2 = jnp.zeros((input_size,), f32)
    v2 = jnp.ones((input_size,), f32)

    # Eval-mode BN as a per-channel affine.
    s1 = g1 / jnp.sqrt(v1 + eps)
    sh1 = be1 - m1 * s1
    s2 = g2 / jnp.sqrt(v2 + eps)
    sh2 = be2 - m2 * s2

    def fold(W, b, s, sh):
        # Fold the BN affine that follows this conv into its weights/bias and
        # reorder to the kernel layout: (K, Cout, Cin), w[k, co, ci] = W[co, ci, k].
        Wf = W * s[:, None, None]
        bf = b * s + sh
        w_kern = jnp.transpose(Wf, (2, 0, 1))
        return w_kern, bf.reshape(-1, 1)

    w1k, b1k = fold(W1, b1, s1, sh1)
    w2k, b2k = fold(W2, b2, s1, sh1)   # the module applies bn1 again after conv2
    w3k, b3k = fold(W3, b3, s2, sh2)

    torch_params = dict(W1=W1, b1=b1, W2=W2, b2=b2, W3=W3, b3=b3,
                        g1=g1, be1=be1, m1=m1, v1=v1,
                        g2=g2, be2=be2, m2=m2, v2=v2, eps=eps)
    kernel_params = dict(w1=w1k, b1=b1k, w2=w2k, b2=b2k, w3=w3k, b3=b3k)
    return torch_params, kernel_params


def reference_forward(x, p):
    """Pure-JAX replica of CNNBlock.forward in eval mode (NCL internally)."""
    eps = p["eps"]

    def conv(h_ncl, W, b):
        y = lax.conv_general_dilated(
            h_ncl, W, window_strides=(1,), padding=[(1, 1)],
            dimension_numbers=("NCH", "OIH", "NCH"))
        return y + b[None, :, None]

    def bn(h_ncl, g, be, m, v):
        return (h_ncl - m[None, :, None]) / jnp.sqrt(v[None, :, None] + eps) \
            * g[None, :, None] + be[None, :, None]

    elu = lambda h: jnp.where(h > 0, h, jnp.exp(jnp.minimum(h, 0.0)) - 1.0)

    residual = x
    h = jnp.transpose(x, (0, 2, 1))                     # (B, C, L)
    h = conv(h, p["W1"], p["b1"])
    h = bn(h, p["g1"], p["be1"], p["m1"], p["v1"])
    h = elu(h)                                          # dropout = identity
    h = conv(h, p["W2"], p["b2"])
    h = bn(h, p["g1"], p["be1"], p["m1"], p["v1"])
    h = elu(h)
    h = conv(h, p["W3"], p["b3"])
    h = bn(h, p["g2"], p["be2"], p["m2"], p["v2"])
    h = jnp.transpose(h, (0, 2, 1))                     # (B, L, C)
    return h + residual


if __name__ == "__main__":
    # B * L = 128 so the demo exercises the lane-dense (multiple-of-128) path.
    B, L, INPUT_SIZE, OUTPUT_SIZE = 8, 16, 4, 8

    root = jax.random.PRNGKey(0)
    kx, kp = jax.random.split(root)
    x = jax.random.normal(kx, (B, L, INPUT_SIZE), jnp.float32)

    torch_params, kernel_params = make_params(kp, INPUT_SIZE, OUTPUT_SIZE)

    out = cnn_block_pallas(x, kernel_params)
    out = jax.block_until_ready(out)

    ref = jax.block_until_ready(reference_forward(x, torch_params))
    assert out.shape == (B, L, INPUT_SIZE)
    assert jnp.allclose(out, ref, rtol=1e-4, atol=1e-5), (
        "Pallas output mismatch vs JAX reference")

    print("KERNEL_OK")
</pallas_src>

<mosaic_0001>
module attributes {stable_mosaic.version = 11 : i64} {
  func.func @cnn_block_kernel(%arg0: i32, %arg1: memref<4x128xf32, #tpu.memory_space<vmem>>, %arg2: memref<1x128xf32, #tpu.memory_space<vmem>>, %arg3: memref<1x128xf32, #tpu.memory_space<vmem>>, %arg4: memref<3x8x4xf32, #tpu.memory_space<vmem>>, %arg5: memref<8x1xf32, #tpu.memory_space<vmem>>, %arg6: memref<3x8x8xf32, #tpu.memory_space<vmem>>, %arg7: memref<8x1xf32, #tpu.memory_space<vmem>>, %arg8: memref<3x4x8xf32, #tpu.memory_space<vmem>>, %arg9: memref<4x1xf32, #tpu.memory_space<vmem>>, %arg10: memref<4x128xf32, #tpu.memory_space<vmem>>) attributes {dimension_semantics = [#tpu.dimension_semantics<parallel>], iteration_bounds = array<i64: 1>, scalar_prefetch = 0 : i64, scratch_operands = 0 : i64, tpu.core_type = #tpu.core_type<tc>, window_params = [{transform_indices = @transform_0, window_bounds = array<i64: 4, 128>}, {pipeline_mode = #tpu.pipeline_mode<synchronous>, transform_indices = @transform_1, window_bounds = array<i64: 1, 128>}, {pipeline_mode = #tpu.pipeline_mode<synchronous>, transform_indices = @transform_2, window_bounds = array<i64: 1, 128>}, {pipeline_mode = #tpu.pipeline_mode<synchronous>, transform_indices = @transform_3, window_bounds = array<i64: 3, 8, 4>}, {pipeline_mode = #tpu.pipeline_mode<synchronous>, transform_indices = @transform_4, window_bounds = array<i64: 8, 1>}, {pipeline_mode = #tpu.pipeline_mode<synchronous>, transform_indices = @transform_5, window_bounds = array<i64: 3, 8, 8>}, {pipeline_mode = #tpu.pipeline_mode<synchronous>, transform_indices = @transform_6, window_bounds = array<i64: 8, 1>}, {pipeline_mode = #tpu.pipeline_mode<synchronous>, transform_indices = @transform_7, window_bounds = array<i64: 3, 4, 8>}, {pipeline_mode = #tpu.pipeline_mode<synchronous>, transform_indices = @transform_8, window_bounds = array<i64: 4, 1>}, {transform_indices = @transform_9, window_bounds = array<i64: 4, 128>}]} {
    %c0 = arith.constant 0 : index
    %c0_0 = arith.constant 0 : index
    %0 = vector.load %arg1[%c0, %c0_0] : memref<4x128xf32, #tpu.memory_space<vmem>>, vector<4x128xf32>
    %c0_1 = arith.constant 0 : index
    %c0_2 = arith.constant 0 : index
    %1 = vector.load %arg2[%c0_1, %c0_2] : memref<1x128xf32, #tpu.memory_space<vmem>>, vector<1x128xf32>
    %c0_3 = arith.constant 0 : index
    %c0_4 = arith.constant 0 : index
    %2 = vector.load %arg3[%c0_3, %c0_4] : memref<1x128xf32, #tpu.memory_space<vmem>>, vector<1x128xf32>
    %c1_i32 = arith.constant 1 : i32
    %3 = tpu.dynamic_rotate %0 by %c1_i32 dim 1 : vector<4x128xf32>, i32 -> vector<4x128xf32>
    %4 = vector.broadcast %1 : vector<1x128xf32> to vector<4x128xf32>
    %5 = arith.mulf %3, %4 : vector<4x128xf32>
    %c127_i32 = arith.constant 127 : i32
    %6 = tpu.dynamic_rotate %0 by %c127_i32 dim 1 : vector<4x128xf32>, i32 -> vector<4x128xf32>
    %7 = vector.broadcast %2 : vector<1x128xf32> to vector<4x128xf32>
    %8 = arith.mulf %6, %7 : vector<4x128xf32>
    %c1 = arith.constant 1 : index
    %c0_5 = arith.constant 0 : index
    %c0_6 = arith.constant 0 : index
    %9 = vector.load %arg4[%c1, %c0_5, %c0_6] : memref<3x8x4xf32, #tpu.memory_space<vmem>>, vector<1x8x4xf32>
    %10 = vector.shape_cast %9 : vector<1x8x4xf32> to vector<8x4xf32>
    %cst = arith.constant dense<0.000000e+00> : vector<8x128xf32>
    %11 = tpu.matmul %10, %0, %cst {dimension_numbers = #tpu.dot_dimension_numbers<[1], [0], [0], [1], [0, 0, 1, 1], [], []>} : vector<8x4xf32>, vector<4x128xf32>, vector<8x128xf32> -> vector<8x128xf32>
    %c0_7 = arith.constant 0 : index
    %c0_8 = arith.constant 0 : index
    %c0_9 = arith.constant 0 : index
    %12 = vector.load %arg4[%c0_7, %c0_8, %c0_9] : memref<3x8x4xf32, #tpu.memory_space<vmem>>, vector<1x8x4xf32>
    %13 = vector.shape_cast %12 : vector<1x8x4xf32> to vector<8x4xf32>
    %cst_10 = arith.constant dense<0.000000e+00> : vector<8x128xf32>
    %14 = tpu.matmul %13, %5, %cst_10 {dimension_numbers = #tpu.dot_dimension_numbers<[1], [0], [0], [1], [0, 0, 1, 1], [], []>} : vector<8x4xf32>, vector<4x128xf32>, vector<8x128xf32> -> vector<8x128xf32>
    %15 = arith.addf %11, %14 : vector<8x128xf32>
    %c2 = arith.constant 2 : index
    %c0_11 = arith.constant 0 : index
    %c0_12 = arith.constant 0 : index
    %16 = vector.load %arg4[%c2, %c0_11, %c0_12] : memref<3x8x4xf32, #tpu.memory_space<vmem>>, vector<1x8x4xf32>
    %17 = vector.shape_cast %16 : vector<1x8x4xf32> to vector<8x4xf32>
    %cst_13 = arith.constant dense<0.000000e+00> : vector<8x128xf32>
    %18 = tpu.matmul %17, %8, %cst_13 {dimension_numbers = #tpu.dot_dimension_numbers<[1], [0], [0], [1], [0, 0, 1, 1], [], []>} : vector<8x4xf32>, vector<4x128xf32>, vector<8x128xf32> -> vector<8x128xf32>
    %19 = arith.addf %15, %18 : vector<8x128xf32>
    %c0_14 = arith.constant 0 : index
    %c0_15 = arith.constant 0 : index
    %20 = vector.load %arg5[%c0_14, %c0_15] : memref<8x1xf32, #tpu.memory_space<vmem>>, vector<8x1xf32>
    %21 = vector.broadcast %20 : vector<8x1xf32> to vector<8x128xf32>
    %22 = arith.addf %19, %21 : vector<8x128xf32>
    %cst_16 = arith.constant 0.000000e+00 : f32
    %23 = vector.broadcast %cst_16 : f32 to vector<8x128xf32>
    %24 = arith.cmpf ogt, %22, %23 : vector<8x128xf32>
    %cst_17 = arith.constant 0.000000e+00 : f32
    %25 = vector.broadcast %cst_17 : f32 to vector<8x128xf32>
    %26 = arith.minimumf %22, %25 : vector<8x128xf32>
    %27 = math.exp %26 : vector<8x128xf32>
    %cst_18 = arith.constant 1.000000e+00 : f32
    %28 = vector.broadcast %cst_18 : f32 to vector<8x128xf32>
    %29 = arith.subf %27, %28 : vector<8x128xf32>
    %30 = arith.select %24, %22, %29 : vector<8x128xi1>, vector<8x128xf32>
    %c1_i32_19 = arith.constant 1 : i32
    %31 = tpu.dynamic_rotate %30 by %c1_i32_19 dim 1 : vector<8x128xf32>, i32 -> vector<8x128xf32>
    %32 = vector.broadcast %1 : vector<1x128xf32> to vector<8x128xf32>
    %33 = arith.mulf %31, %32 : vector<8x128xf32>
    %c127_i32_20 = arith.constant 127 : i32
    %34 = tpu.dynamic_rotate %30 by %c127_i32_20 dim 1 : vector<8x128xf32>, i32 -> vector<8x128xf32>
    %35 = vector.broadcast %2 : vector<1x128xf32> to vector<8x128xf32>
    %36 = arith.mulf %34, %35 : vector<8x128xf32>
    %c1_21 = arith.constant 1 : index
    %c0_22 = arith.constant 0 : index
    %c0_23 = arith.constant 0 : index
    %37 = vector.load %arg6[%c1_21, %c0_22, %c0_23] : memref<3x8x8xf32, #tpu.memory_space<vmem>>, vector<1x8x8xf32>
    %38 = vector.shape_cast %37 : vector<1x8x8xf32> to vector<8x8xf32>
    %cst_24 = arith.constant dense<0.000000e+00> : vector<8x128xf32>
    %39 = tpu.matmul %38, %30, %cst_24 {dimension_numbers = #tpu.dot_dimension_numbers<[1], [0], [0], [1], [0, 0, 1, 1], [], []>} : vector<8x8xf32>, vector<8x128xf32>, vector<8x128xf32> -> vector<8x128xf32>
    %c0_25 = arith.constant 0 : index
    %c0_26 = arith.constant 0 : index
    %c0_27 = arith.constant 0 : index
    %40 = vector.load %arg6[%c0_25, %c0_26, %c0_27] : memref<3x8x8xf32, #tpu.memory_space<vmem>>, vector<1x8x8xf32>
    %41 = vector.shape_cast %40 : vector<1x8x8xf32> to vector<8x8xf32>
    %cst_28 = arith.constant dense<0.000000e+00> : vector<8x128xf32>
    %42 = tpu.matmul %41, %33, %cst_28 {dimension_numbers = #tpu.dot_dimension_numbers<[1], [0], [0], [1], [0, 0, 1, 1], [], []>} : vector<8x8xf32>, vector<8x128xf32>, vector<8x128xf32> -> vector<8x128xf32>
    %43 = arith.addf %39, %42 : vector<8x128xf32>
    %c2_29 = arith.constant 2 : index
    %c0_30 = arith.constant 0 : index
    %c0_31 = arith.constant 0 : index
    %44 = vector.load %arg6[%c2_29, %c0_30, %c0_31] : memref<3x8x8xf32, #tpu.memory_space<vmem>>, vector<1x8x8xf32>
    %45 = vector.shape_cast %44 : vector<1x8x8xf32> to vector<8x8xf32>
    %cst_32 = arith.constant dense<0.000000e+00> : vector<8x128xf32>
    %46 = tpu.matmul %45, %36, %cst_32 {dimension_numbers = #tpu.dot_dimension_numbers<[1], [0], [0], [1], [0, 0, 1, 1], [], []>} : vector<8x8xf32>, vector<8x128xf32>, vector<8x128xf32> -> vector<8x128xf32>
    %47 = arith.addf %43, %46 : vector<8x128xf32>
    %c0_33 = arith.constant 0 : index
    %c0_34 = arith.constant 0 : index
    %48 = vector.load %arg7[%c0_33, %c0_34] : memref<8x1xf32, #tpu.memory_space<vmem>>, vector<8x1xf32>
    %49 = vector.broadcast %48 : vector<8x1xf32> to vector<8x128xf32>
    %50 = arith.addf %47, %49 : vector<8x128xf32>
    %cst_35 = arith.constant 0.000000e+00 : f32
    %51 = vector.broadcast %cst_35 : f32 to vector<8x128xf32>
    %52 = arith.cmpf ogt, %50, %51 : vector<8x128xf32>
    %cst_36 = arith.constant 0.000000e+00 : f32
    %53 = vector.broadcast %cst_36 : f32 to vector<8x128xf32>
    %54 = arith.minimumf %50, %53 : vector<8x128xf32>
    %55 = math.exp %54 : vector<8x128xf32>
    %cst_37 = arith.constant 1.000000e+00 : f32
    %56 = vector.broadcast %cst_37 : f32 to vector<8x128xf32>
    %57 = arith.subf %55, %56 : vector<8x128xf32>
    %58 = arith.select %52, %50, %57 : vector<8x128xi1>, vector<8x128xf32>
    %c1_i32_38 = arith.constant 1 : i32
    %59 = tpu.dynamic_rotate %58 by %c1_i32_38 dim 1 : vector<8x128xf32>, i32 -> vector<8x128xf32>
    %60 = vector.broadcast %1 : vector<1x128xf32> to vector<8x128xf32>
    %61 = arith.mulf %59, %60 : vector<8x128xf32>
    %c127_i32_39 = arith.constant 127 : i32
    %62 = tpu.dynamic_rotate %58 by %c127_i32_39 dim 1 : vector<8x128xf32>, i32 -> vector<8x128xf32>
    %63 = vector.broadcast %2 : vector<1x128xf32> to vector<8x128xf32>
    %64 = arith.mulf %62, %63 : vector<8x128xf32>
    %c1_40 = arith.constant 1 : index
    %c0_41 = arith.constant 0 : index
    %c0_42 = arith.constant 0 : index
    %65 = vector.load %arg8[%c1_40, %c0_41, %c0_42] : memref<3x4x8xf32, #tpu.memory_space<vmem>>, vector<1x4x8xf32>
    %66 = vector.shape_cast %65 : vector<1x4x8xf32> to vector<4x8xf32>
    %cst_43 = arith.constant dense<0.000000e+00> : vector<4x128xf32>
    %67 = tpu.matmul %66, %58, %cst_43 {dimension_numbers = #tpu.dot_dimension_numbers<[1], [0], [0], [1], [0, 0, 1, 1], [], []>} : vector<4x8xf32>, vector<8x128xf32>, vector<4x128xf32> -> vector<4x128xf32>
    %c0_44 = arith.constant 0 : index
    %c0_45 = arith.constant 0 : index
    %c0_46 = arith.constant 0 : index
    %68 = vector.load %arg8[%c0_44, %c0_45, %c0_46] : memref<3x4x8xf32, #tpu.memory_space<vmem>>, vector<1x4x8xf32>
    %69 = vector.shape_cast %68 : vector<1x4x8xf32> to vector<4x8xf32>
    %cst_47 = arith.constant dense<0.000000e+00> : vector<4x128xf32>
    %70 = tpu.matmul %69, %61, %cst_47 {dimension_numbers = #tpu.dot_dimension_numbers<[1], [0], [0], [1], [0, 0, 1, 1], [], []>} : vector<4x8xf32>, vector<8x128xf32>, vector<4x128xf32> -> vector<4x128xf32>
    %71 = arith.addf %67, %70 : vector<4x128xf32>
    %c2_48 = arith.constant 2 : index
    %c0_49 = arith.constant 0 : index
    %c0_50 = arith.constant 0 : index
    %72 = vector.load %arg8[%c2_48, %c0_49, %c0_50] : memref<3x4x8xf32, #tpu.memory_space<vmem>>, vector<1x4x8xf32>
    %73 = vector.shape_cast %72 : vector<1x4x8xf32> to vector<4x8xf32>
    %cst_51 = arith.constant dense<0.000000e+00> : vector<4x128xf32>
    %74 = tpu.matmul %73, %64, %cst_51 {dimension_numbers = #tpu.dot_dimension_numbers<[1], [0], [0], [1], [0, 0, 1, 1], [], []>} : vector<4x8xf32>, vector<8x128xf32>, vector<4x128xf32> -> vector<4x128xf32>
    %75 = arith.addf %71, %74 : vector<4x128xf32>
    %c0_52 = arith.constant 0 : index
    %c0_53 = arith.constant 0 : index
    %76 = vector.load %arg9[%c0_52, %c0_53] : memref<4x1xf32, #tpu.memory_space<vmem>>, vector<4x1xf32>
    %77 = vector.broadcast %76 : vector<4x1xf32> to vector<4x128xf32>
    %78 = arith.addf %75, %77 : vector<4x128xf32>
    %79 = arith.addf %78, %0 : vector<4x128xf32>
    %c0_54 = arith.constant 0 : index
    %c0_55 = arith.constant 0 : index
    %80 = vector.load %arg10[%c0_54, %c0_55] : memref<4x128xf32, #tpu.memory_space<vmem>>, vector<4x128xf32>
    tpu.vector_store %arg10[%c0_54, %c0_55], %79 {strides = array<i32>} : memref<4x128xf32, #tpu.memory_space<vmem>>, vector<4x128xf32>,
    return
  }
  func.func @transform_0(%arg0: i32) -> (i32, i32) {
    %c0_i32 = arith.constant 0 : i32
    %c0_i32_0 = arith.constant 0 : i32
    return %c0_i32, %arg0 : i32, i32
  }
  func.func @transform_1(%arg0: i32) -> (i32, i32) {
    %c0_i32 = arith.constant 0 : i32
    %c0_i32_0 = arith.constant 0 : i32
    %c0_i32_1 = arith.constant 0 : i32
    return %c0_i32, %c0_i32_0 : i32, i32
  }
  func.func @transform_2(%arg0: i32) -> (i32, i32) {
    %c0_i32 = arith.constant 0 : i32
    %c0_i32_0 = arith.constant 0 : i32
    %c0_i32_1 = arith.constant 0 : i32
    return %c0_i32, %c0_i32_0 : i32, i32
  }
  func.func @transform_3(%arg0: i32) -> (i32, i32, i32) {
    %c0_i32 = arith.constant 0 : i32
    %c0_i32_0 = arith.constant 0 : i32
    %c0_i32_1 = arith.constant 0 : i32
    %c0_i32_2 = arith.constant 0 : i32
    return %c0_i32, %c0_i32_0, %c0_i32_1 : i32, i32, i32
  }
  func.func @transform_4(%arg0: i32) -> (i32, i32) {
    %c0_i32 = arith.constant 0 : i32
    %c0_i32_0 = arith.constant 0 : i32
    %c0_i32_1 = arith.constant 0 : i32
    return %c0_i32, %c0_i32_0 : i32, i32
  }
  func.func @transform_5(%arg0: i32) -> (i32, i32, i32) {
    %c0_i32 = arith.constant 0 : i32
    %c0_i32_0 = arith.constant 0 : i32
    %c0_i32_1 = arith.constant 0 : i32
    %c0_i32_2 = arith.constant 0 : i32
    return %c0_i32, %c0_i32_0, %c0_i32_1 : i32, i32, i32
  }
  func.func @transform_6(%arg0: i32) -> (i32, i32) {
    %c0_i32 = arith.constant 0 : i32
    %c0_i32_0 = arith.constant 0 : i32
    %c0_i32_1 = arith.constant 0 : i32
    return %c0_i32, %c0_i32_0 : i32, i32
  }
  func.func @transform_7(%arg0: i32) -> (i32, i32, i32) {
    %c0_i32 = arith.constant 0 : i32
    %c0_i32_0 = arith.constant 0 : i32
    %c0_i32_1 = arith.constant 0 : i32
    %c0_i32_2 = arith.constant 0 : i32
    return %c0_i32, %c0_i32_0, %c0_i32_1 : i32, i32, i32
  }
  func.func @transform_8(%arg0: i32) -> (i32, i32) {
    %c0_i32 = arith.constant 0 : i32
    %c0_i32_0 = arith.constant 0 : i32
    %c0_i32_1 = arith.constant 0 : i32
    return %c0_i32, %c0_i32_0 : i32, i32
  }
  func.func @transform_9(%arg0: i32) -> (i32, i32) {
    %c0_i32 = arith.constant 0 : i32
    %c0_i32_0 = arith.constant 0 : i32
    return %c0_i32, %arg0 : i32, i32
  }
}

</mosaic_0001>

<llo_original>
// kernel: tpu_custom_call.1
$region0: #{tpu_custom_call.1}
  #allocation0 [shape = 'u32[]', space=smem, size = 0x4, offset = 0x4, fixed_abs, tag = 'smem constant byte address 0x4 - core index']
  #allocation1 [shape = 'u32[144,128]{1,0:T(1,128)}', space=vmem, size = 0x12000, scoped, tag = 'internal scratch']
  %s0 = inlined_call_operand.vmem [shape: f32[4,128], index: 0, kind: input, shape index: {}]
  %s1 = inlined_call_operand.vmem [shape: f32[1,128], index: 1, kind: input, shape index: {}]
  %s2 = inlined_call_operand.vmem [shape: f32[1,128], index: 2, kind: input, shape index: {}]
  %s3 = inlined_call_operand.vmem [shape: f32[3,8,4], index: 3, kind: input, shape index: {}]
  %s4 = inlined_call_operand.vmem [shape: f32[8,1], index: 4, kind: input, shape index: {}]
  %s5 = inlined_call_operand.vmem [shape: f32[3,8,8], index: 5, kind: input, shape index: {}]
  %s6 = inlined_call_operand.vmem [shape: f32[8,1], index: 6, kind: input, shape index: {}]
  %s7 = inlined_call_operand.vmem [shape: f32[3,4,8], index: 7, kind: input, shape index: {}]
  %s8 = inlined_call_operand.vmem [shape: f32[4,1], index: 8, kind: input, shape index: {}]
  %s9 = inlined_call_operand.hbm [shape: f32[4,128], index: 9, kind: output, shape index: {}]
  %s10 = sld [smem:[#allocation0]]
  $region46: #{tpu_custom_call.1} parent=0
    _
  %s12 = ssub.s32 1, %s10
  %s13 = scalar_select 0, %s12, %s10
  $region1: #{tpu_custom_call.1} parent=0
    #allocation2 [shape = 'u8[2048]{0}', space=vmem, size = 0x800, scoped, tag = 'output window, operand 0, single buffered']
    #allocation3 [shape = 's32[1]{0}', space=sflag, size = 0x4, scoped, tag = 'scoped memory for tpu_custom_call.1']
    %14 = vsyncpa [#allocation3], 0
    // Predicated region
    $region2: #{tpu_custom_call.1} parent=1 // pred_check
      _
    $region3: #{tpu_custom_call.1} parent=1 // pred_check_branch
      %16 = sbr.rel (0) target = $region5
    $region4: #{tpu_custom_call.1} parent=1 // pred_region
      _
    $region5: #{tpu_custom_call.1} parent=1 // pred_fallthru
      _
    // Predicated region
    $region6: #{tpu_custom_call.1} parent=1 // pred_check
      _
    $region7: #{tpu_custom_call.1} parent=1 // pred_check_branch
      %18 = sbr.rel (0) target = $region9
    $region8: #{tpu_custom_call.1} parent=1 // pred_region
      _
    $region9: #{tpu_custom_call.1} parent=1 // pred_fallthru
      _
    // Predicated region
    $region10: #{tpu_custom_call.1} parent=1 // pred_check
      _
    $region11: #{tpu_custom_call.1} parent=1 // pred_check_branch
      %20 = sbr.rel (0) target = $region13
    $region12: #{tpu_custom_call.1} parent=1 // pred_region
      _
    $region13: #{tpu_custom_call.1} parent=1 // pred_fallthru
      _
    // Predicated region
    $region14: #{tpu_custom_call.1} parent=1 // pred_check
      _
    $region15: #{tpu_custom_call.1} parent=1 // pred_check_branch
      %22 = sbr.rel (0) target = $region17
    $region16: #{tpu_custom_call.1} parent=1 // pred_region
      _
    $region17: #{tpu_custom_call.1} parent=1 // pred_fallthru
      _
    // Predicated region
    $region18: #{tpu_custom_call.1} parent=1 // pred_check
      _
    $region19: #{tpu_custom_call.1} parent=1 // pred_check_branch
      %24 = sbr.rel (0) target = $region21
    $region20: #{tpu_custom_call.1} parent=1 // pred_region
      _
    $region21: #{tpu_custom_call.1} parent=1 // pred_fallthru
      _
    // Predicated region
    $region22: #{tpu_custom_call.1} parent=1 // pred_check
      _
    $region23: #{tpu_custom_call.1} parent=1 // pred_check_branch
      %26 = sbr.rel (0) target = $region25
    $region24: #{tpu_custom_call.1} parent=1 // pred_region
      _
    $region25: #{tpu_custom_call.1} parent=1 // pred_fallthru
      _
    // Predicated region
    $region26: #{tpu_custom_call.1} parent=1 // pred_check
      _
    $region27: #{tpu_custom_call.1} parent=1 // pred_check_branch
      %28 = sbr.rel (0) target = $region29
    $region28: #{tpu_custom_call.1} parent=1 // pred_region
      _
    $region29: #{tpu_custom_call.1} parent=1 // pred_fallthru
      _
    // Predicated region
    $region30: #{tpu_custom_call.1} parent=1 // pred_check
      _
    $region31: #{tpu_custom_call.1} parent=1 // pred_check_branch
      %30 = sbr.rel (0) target = $region33
    $region32: #{tpu_custom_call.1} parent=1 // pred_region
      _
    $region33: #{tpu_custom_call.1} parent=1 // pred_fallthru
      _
    // Predicated region
    $region34: #{tpu_custom_call.1} parent=1 // pred_check
      _
    $region35: #{tpu_custom_call.1} parent=1 // pred_check_branch
      %32 = sbr.rel (0) target = $region37
    $region36: #{tpu_custom_call.1} parent=1 // pred_region
      _
    $region37: #{tpu_custom_call.1} parent=1 // pred_fallthru
      _
    %v33 = vld [vmem:[%s0] sm:$0xf]
    %v34 = vld [vmem:[%s1] sm:$0x1]
    %v35 = vld [vmem:[%s2] sm:$0x1]
    %36 = vrot.lane.b32.xlu0 %v33, 1
    %v37 = vpop.permute.xlu0 %36
    %v39 = vlaneseq
    %v40 = vshrl.u32 %v39, 7
    %v41 = vsub.s32 0, %v40
    %v42 = vrot.slane %v34, %v41
    %v44 = vmul.f32 %v37, %v42
    %45 = vrot.lane.b32.xlu0 %v33, 127
    %v46 = vpop.permute.xlu0 %45
    %v48 = vlaneseq
    %v49 = vshrl.u32 %v48, 7
    %v50 = vsub.s32 0, %v49
    %v51 = vrot.slane %v35, %v50
    %v53 = vmul.f32 %v46, %v51
    %s54 = scalar_lea.vmem %s3, 8
    %v55 = vld [vmem:[%s54] sm:$0xff]
    %v56 = vld [vmem:[%s3] sm:$0xff]
    %vm57 = vcmask 31744
    %v59 = vsel %vm57, %v56, 0
    %vm61 = vcmask 1043456
    %v63 = vsel %vm61, %v44, 0
    %65 = vmatprep.subr.mxu0 0.0
    %66 = vmatpush1.msra.mxu0 %v63
    %67 = vmatprep.subr.mxu0 0.0
    %68 = vmatpush1.msra.mxu0 0.0
    %69 = vmatprep.subr.mxu0 0.0
    %70 = vmatpush1.msra.mxu0 0.0
    %71 = vmatprep.subr.mxu0 0.0
    %72 = vmatpush1.msra.mxu0 0.0
    %73 = vmatprep.subr.mxu0 0.0
    %74 = vmatpush1.msra.mxu0 0.0
    %75 = vmatprep.subr.mxu0 0.0
    %76 = vmatpush1.msra.mxu0 0.0
    %77 = vmatprep.subr.mxu0 0.0
    %78 = vmatpush1.msra.mxu0 0.0
    %79 = vmatprep.subr.mxu0 0.0
    %80 = vmatpush1.msra.mxu0 0.0
    %81 = vmatprep.subr.mxu0 0.0
    %82 = vmatpush1.msra.mxu0 0.0
    %83 = vmatprep.subr.mxu0 0.0
    %84 = vmatpush1.msra.mxu0 0.0
    %85 = vmatprep.subr.mxu0 0.0
    %86 = vmatpush1.msra.mxu0 0.0
    %87 = vmatprep.subr.mxu0 0.0
    %88 = vmatpush1.msra.mxu0 0.0
    %89 = vmatprep.subr.mxu0 0.0
    %90 = vmatpush1.msra.mxu0 0.0
    %91 = vmatprep.subr.mxu0 0.0
    %92 = vmatpush1.msra.mxu0 0.0
    %93 = vmatprep.subr.mxu0 0.0
    %94 = vmatpush1.msra.mxu0 0.0
    %95 = vmatprep.subr.mxu0 0.0
    %96 = vmatpush1.msra.mxu0 0.0
    %97 = vmatprep.subr.mxu0 0.0
    %98 = vmatpush1.msra.mxu0 0.0
    %99 = vmatprep.subr.mxu0 0.0
    %100 = vmatpush1.msra.mxu0 0.0
    %101 = vmatprep.subr.mxu0 0.0
    %102 = vmatpush1.msra.mxu0 0.0
    %103 = vmatprep.subr.mxu0 0.0
    %104 = vmatpush1.msra.mxu0 0.0
    %105 = vmatprep.subr.mxu0 0.0
    %106 = vmatpush1.msra.mxu0 0.0
    %107 = vmatprep.subr.mxu0 0.0
    %108 = vmatpush1.msra.mxu0 0.0
    %109 = vmatprep.subr.mxu0 0.0
    %110 = vmatpush1.msra.mxu0 0.0
    %111 = vmatprep.subr.mxu0 0.0
    %112 = vmatpush1.msra.mxu0 0.0
    %113 = vmatprep.subr.mxu0 0.0
    %114 = vmatpush1.msra.mxu0 0.0
    %115 = vmatprep.subr.mxu0 0.0
    %116 = vmatpush1.msra.mxu0 0.0
    %117 = vmatprep.subr.mxu0 0.0
    %118 = vmatpush1.msra.mxu0 0.0
    %119 = vmatprep.subr.mxu0 0.0
    %120 = vmatpush1.msra.mxu0 0.0
    %121 = vmatprep.subr.mxu0 0.0
    %122 = vmatpush1.msra.mxu0 0.0
    %123 = vmatprep.subr.mxu0 0.0
    %124 = vmatpush1.msra.mxu0 0.0
    %125 = vmatprep.subr.mxu0 0.0
    %126 = vmatpush1.msra.mxu0 0.0
    %127 = vmatprep.subr.mxu0 0.0
    %128 = vmatpush1.msra.mxu0 0.0
    %129 = vmatprep.mubr.f32.mxu0 0.0
    %130 = vmatmul.mubr.f32.gmra.mrb[0].mxu0 %v59
    %v131 = vpop.f32.mrb[0].mxu0
    %v132 = vadd.f32 0.0, %v131
    %v133 = vpop.f32.mrb[0].mxu0
    %134 = vdwg.mxu0
    %v136 = vsel %vm57, %v55, 0
    %v139 = vsel %vm61, %v33, 0
    %141 = vmatprep.subr.mxu0 0.0
    %142 = vmatpush1.msra.mxu0 %v139
    %143 = vmatprep.subr.mxu0 0.0
    %144 = vmatpush1.msra.mxu0 0.0
    %145 = vmatprep.subr.mxu0 0.0
    %146 = vmatpush1.msra.mxu0 0.0
    %147 = vmatprep.subr.mxu0 0.0
    %148 = vmatpush1.msra.mxu0 0.0
    %149 = vmatprep.subr.mxu0 0.0
    %150 = vmatpush1.msra.mxu0 0.0
    %151 = vmatprep.subr.mxu0 0.0
    %152 = vmatpush1.msra.mxu0 0.0
    %153 = vmatprep.subr.mxu0 0.0
    %154 = vmatpush1.msra.mxu0 0.0
    %155 = vmatprep.subr.mxu0 0.0
    %156 = vmatpush1.msra.mxu0 0.0
    %157 = vmatprep.subr.mxu0 0.0
    %158 = vmatpush1.msra.mxu0 0.0
    %159 = vmatprep.subr.mxu0 0.0
    %160 = vmatpush1.msra.mxu0 0.0
    %161 = vmatprep.subr.mxu0 0.0
    %162 = vmatpush1.msra.mxu0 0.0
    %163 = vmatprep.subr.mxu0 0.0
    %164 = vmatpush1.msra.mxu0 0.0
    %165 = vmatprep.subr.mxu0 0.0
    %166 = vmatpush1.msra.mxu0 0.0
    %167 = vmatprep.subr.mxu0 0.0
    %168 = vmatpush1.msra.mxu0 0.0
    %169 = vmatprep.subr.mxu0 0.0
    %170 = vmatpush1.msra.mxu0 0.0
    %171 = vmatprep.subr.mxu0 0.0
    %172 = vmatpush1.msra.mxu0 0.0
    %173 = vmatprep.subr.mxu0 0.0
    %174 = vmatpush1.msra.mxu0 0.0
    %175 = vmatprep.subr.mxu0 0.0
    %176 = vmatpush1.msra.mxu0 0.0
    %177 = vmatprep.subr.mxu0 0.0
    %178 = vmatpush1.msra.mxu0 0.0
    %179 = vmatprep.subr.mxu0 0.0
    %180 = vmatpush1.msra.mxu0 0.0
    %181 = vmatprep.subr.mxu0 0.0
    %182 = vmatpush1.msra.mxu0 0.0
    %183 = vmatprep.subr.mxu0 0.0
    %184 = vmatpush1.msra.mxu0 0.0
    %185 = vmatprep.subr.mxu0 0.0
    %186 = vmatpush1.msra.mxu0 0.0
    %187 = vmatprep.subr.mxu0 0.0
    %188 = vmatpush1.msra.mxu0 0.0
    %189 = vmatprep.subr.mxu0 0.0
    %190 = vmatpush1.msra.mxu0 0.0
    %191 = vmatprep.subr.mxu0 0.0
    %192 = vmatpush1.msra.mxu0 0.0
    %193 = vmatprep.subr.mxu0 0.0
    %194 = vmatpush1.msra.mxu0 0.0
    %195 = vmatprep.subr.mxu0 0.0
    %196 = vmatpush1.msra.mxu0 0.0
    %197 = vmatprep.subr.mxu0 0.0
    %198 = vmatpush1.msra.mxu0 0.0
    %199 = vmatprep.subr.mxu0 0.0
    %200 = vmatpush1.msra.mxu0 0.0
    %201 = vmatprep.subr.mxu0 0.0
    %202 = vmatpush1.msra.mxu0 0.0
    %203 = vmatprep.subr.mxu0 0.0
    %204 = vmatpush1.msra.mxu0 0.0
    %205 = vmatprep.mubr.f32.mxu0 0.0
    %206 = vmatmul.mubr.f32.gmra.mrb[0].mxu0 %v136
    %v207 = vpop.f32.mrb[0].mxu0
    %v208 = vadd.f32 %v132, %v207
    %v209 = vpop.f32.mrb[0].mxu0
    %210 = vdwg.mxu0
    %s211 = scalar_lea.vmem %s3, 16
    %v212 = vld [vmem:[%s211] sm:$0xff]
    %v214 = vsel %vm57, %v212, 0
    %v217 = vsel %vm61, %v53, 0
    %219 = vmatprep.subr.mxu0 0.0
    %220 = vmatpush1.msra.mxu0 %v217
    %221 = vmatprep.subr.mxu0 0.0
    %222 = vmatpush1.msra.mxu0 0.0
    %223 = vmatprep.subr.mxu0 0.0
    %224 = vmatpush1.msra.mxu0 0.0
    %225 = vmatprep.subr.mxu0 0.0
    %226 = vmatpush1.msra.mxu0 0.0
    %227 = vmatprep.subr.mxu0 0.0
    %228 = vmatpush1.msra.mxu0 0.0
    %229 = vmatprep.subr.mxu0 0.0
    %230 = vmatpush1.msra.mxu0 0.0
    %231 = vmatprep.subr.mxu0 0.0
    %232 = vmatpush1.msra.mxu0 0.0
    %233 = vmatprep.subr.mxu0 0.0
    %234 = vmatpush1.msra.mxu0 0.0
    %235 = vmatprep.subr.mxu0 0.0
    %236 = vmatpush1.msra.mxu0 0.0
    %237 = vmatprep.subr.mxu0 0.0
    %238 = vmatpush1.msra.mxu0 0.0
    %239 = vmatprep.subr.mxu0 0.0
    %240 = vmatpush1.msra.mxu0 0.0
    %241 = vmatprep.subr.mxu0 0.0
    %242 = vmatpush1.msra.mxu0 0.0
    %243 = vmatprep.subr.mxu0 0.0
    %244 = vmatpush1.msra.mxu0 0.0
    %245 = vmatprep.subr.mxu0 0.0
    %246 = vmatpush1.msra.mxu0 0.0
    %247 = vmatprep.subr.mxu0 0.0
    %248 = vmatpush1.msra.mxu0 0.0
    %249 = vmatprep.subr.mxu0 0.0
    %250 = vmatpush1.msra.mxu0 0.0
    %251 = vmatprep.subr.mxu0 0.0
    %252 = vmatpush1.msra.mxu0 0.0
    %253 = vmatprep.subr.mxu0 0.0
    %254 = vmatpush1.msra.mxu0 0.0
    %255 = vmatprep.subr.mxu0 0.0
    %256 = vmatpush1.msra.mxu0 0.0
    %257 = vmatprep.subr.mxu0 0.0
    %258 = vmatpush1.msra.mxu0 0.0
    %259 = vmatprep.subr.mxu0 0.0
    %260 = vmatpush1.msra.mxu0 0.0
    %261 = vmatprep.subr.mxu0 0.0
    %262 = vmatpush1.msra.mxu0 0.0
    %263 = vmatprep.subr.mxu0 0.0
    %264 = vmatpush1.msra.mxu0 0.0
    %265 = vmatprep.subr.mxu0 0.0
    %266 = vmatpush1.msra.mxu0 0.0
    %267 = vmatprep.subr.mxu0 0.0
    %268 = vmatpush1.msra.mxu0 0.0
    %269 = vmatprep.subr.mxu0 0.0
    %270 = vmatpush1.msra.mxu0 0.0
    %271 = vmatprep.subr.mxu0 0.0
    %272 = vmatpush1.msra.mxu0 0.0
    %273 = vmatprep.subr.mxu0 0.0
    %274 = vmatpush1.msra.mxu0 0.0
    %275 = vmatprep.subr.mxu0 0.0
    %276 = vmatpush1.msra.mxu0 0.0
    %277 = vmatprep.subr.mxu0 0.0
    %278 = vmatpush1.msra.mxu0 0.0
    %279 = vmatprep.subr.mxu0 0.0
    %280 = vmatpush1.msra.mxu0 0.0
    %281 = vmatprep.subr.mxu0 0.0
    %282 = vmatpush1.msra.mxu0 0.0
    %283 = vmatprep.mubr.f32.mxu0 0.0
    %284 = vmatmul.mubr.f32.gmra.mrb[0].mxu0 %v214
    %v285 = vpop.f32.mrb[0].mxu0
    %v286 = vadd.f32 0.0, %v285
    %v287 = vpop.f32.mrb[0].mxu0
    %288 = vdwg.mxu0
    %v289 = vadd.f32 %v208, %v286
    %v290 = vld [vmem:[%s4] sm:$0xff]
    %292 = vset.pattern.permute.xlu0 0
    %293 = vperm.xlu0 %292, %v290
    %v294 = vpop.permute.xlu0 %293
    %v296 = vadd.f32 %v289, %v294
    %vm297 = vcmp.gt.f32.partialorder %v296, 0.0
    %v298 = vmin.f32 %v296, 0.0
    %v299 = vmul.f32 %v298, 1.442695
    %v300 = vpow.pop %v299
    %v301 = vsub.f32 %v300, 1.0
    %v302 = vsel %vm297, %v296, %v301
    %303 = vrot.lane.b32.xlu0 %v302, 1
    %v304 = vpop.permute.xlu0 %303
    %v305 = vmul.f32 %v304, %v42
    %306 = vrot.lane.b32.xlu0 %v302, 127
    %v307 = vpop.permute.xlu0 %306
    %v308 = vmul.f32 %v307, %v51
    %s309 = scalar_lea.vmem %s5, 8
    %v310 = vld [vmem:[%s309] sm:$0xff]
    %v311 = vld [vmem:[%s5] sm:$0xff]
    %vm312 = vcmask 64512
    %v314 = vsel %vm312, %v311, 0
    %316 = vmatprep.subr.mxu0 0.0
    %317 = vmatpush1.msra.mxu0 %v305
    %318 = vmatprep.subr.mxu0 0.0
    %319 = vmatpush1.msra.mxu0 0.0
    %320 = vmatprep.subr.mxu0 0.0
    %321 = vmatpush1.msra.mxu0 0.0
    %322 = vmatprep.subr.mxu0 0.0
    %323 = vmatpush1.msra.mxu0 0.0
    %324 = vmatprep.subr.mxu0 0.0
    %325 = vmatpush1.msra.mxu0 0.0
    %326 = vmatprep.subr.mxu0 0.0
    %327 = vmatpush1.msra.mxu0 0.0
    %328 = vmatprep.subr.mxu0 0.0
    %329 = vmatpush1.msra.mxu0 0.0
    %330 = vmatprep.subr.mxu0 0.0
    %331 = vmatpush1.msra.mxu0 0.0
    %332 = vmatprep.subr.mxu0 0.0
    %333 = vmatpush1.msra.mxu0 0.0
    %334 = vmatprep.subr.mxu0 0.0
    %335 = vmatpush1.msra.mxu0 0.0
    %336 = vmatprep.subr.mxu0 0.0
    %337 = vmatpush1.msra.mxu0 0.0
    %338 = vmatprep.subr.mxu0 0.0
    %339 = vmatpush1.msra.mxu0 0.0
    %340 = vmatprep.subr.mxu0 0.0
    %341 = vmatpush1.msra.mxu0 0.0
    %342 = vmatprep.subr.mxu0 0.0
    %343 = vmatpush1.msra.mxu0 0.0
    %344 = vmatprep.subr.mxu0 0.0
    %345 = vmatpush1.msra.mxu0 0.0
    %346 = vmatprep.subr.mxu0 0.0
    %347 = vmatpush1.msra.mxu0 0.0
    %348 = vmatprep.subr.mxu0 0.0
    %349 = vmatpush1.msra.mxu0 0.0
    %350 = vmatprep.subr.mxu0 0.0
    %351 = vmatpush1.msra.mxu0 0.0
    %352 = vmatprep.subr.mxu0 0.0
    %353 = vmatpush1.msra.mxu0 0.0
    %354 = vmatprep.subr.mxu0 0.0
    %355 = vmatpush1.msra.mxu0 0.0
    %356 = vmatprep.subr.mxu0 0.0
    %357 = vmatpush1.msra.mxu0 0.0
    %358 = vmatprep.subr.mxu0 0.0
    %359 = vmatpush1.msra.mxu0 0.0
    %360 = vmatprep.subr.mxu0 0.0
    %361 = vmatpush1.msra.mxu0 0.0
    %362 = vmatprep.subr.mxu0 0.0
    %363 = vmatpush1.msra.mxu0 0.0
    %364 = vmatprep.subr.mxu0 0.0
    %365 = vmatpush1.msra.mxu0 0.0
    %366 = vmatprep.subr.mxu0 0.0
    %367 = vmatpush1.msra.mxu0 0.0
    %368 = vmatprep.subr.mxu0 0.0
    %369 = vmatpush1.msra.mxu0 0.0
    %370 = vmatprep.subr.mxu0 0.0
    %371 = vmatpush1.msra.mxu0 0.0
    %372 = vmatprep.subr.mxu0 0.0
    %373 = vmatpush1.msra.mxu0 0.0
    %374 = vmatprep.subr.mxu0 0.0
    %375 = vmatpush1.msra.mxu0 0.0
    %376 = vmatprep.subr.mxu0 0.0
    %377 = vmatpush1.msra.mxu0 0.0
    %378 = vmatprep.subr.mxu0 0.0
    %379 = vmatpush1.msra.mxu0 0.0
    %380 = vmatprep.mubr.f32.mxu0 0.0
    %381 = vmatmul.mubr.f32.gmra.mrb[0].mxu0 %v314
    %v382 = vpop.f32.mrb[0].mxu0
    %v383 = vadd.f32 0.0, %v382
    %v384 = vpop.f32.mrb[0].mxu0
    %385 = vdwg.mxu0
    %v387 = vsel %vm312, %v310, 0
    %389 = vmatprep.subr.mxu0 0.0
    %390 = vmatpush1.msra.mxu0 %v302
    %391 = vmatprep.subr.mxu0 0.0
    %392 = vmatpush1.msra.mxu0 0.0
    %393 = vmatprep.subr.mxu0 0.0
    %394 = vmatpush1.msra.mxu0 0.0
    %395 = vmatprep.subr.mxu0 0.0
    %396 = vmatpush1.msra.mxu0 0.0
    %397 = vmatprep.subr.mxu0 0.0
    %398 = vmatpush1.msra.mxu0 0.0
    %399 = vmatprep.subr.mxu0 0.0
    %400 = vmatpush1.msra.mxu0 0.0
    %401 = vmatprep.subr.mxu0 0.0
    %402 = vmatpush1.msra.mxu0 0.0
    %403 = vmatprep.subr.mxu0 0.0
    %404 = vmatpush1.msra.mxu0 0.0
    %405 = vmatprep.subr.mxu0 0.0
    %406 = vmatpush1.msra.mxu0 0.0
    %407 = vmatprep.subr.mxu0 0.0
    %408 = vmatpush1.msra.mxu0 0.0
    %409 = vmatprep.subr.mxu0 0.0
    %410 = vmatpush1.msra.mxu0 0.0
    %411 = vmatprep.subr.mxu0 0.0
    %412 = vmatpush1.msra.mxu0 0.0
    %413 = vmatprep.subr.mxu0 0.0
    %414 = vmatpush1.msra.mxu0 0.0
    %415 = vmatprep.subr.mxu0 0.0
    %416 = vmatpush1.msra.mxu0 0.0
    %417 = vmatprep.subr.mxu0 0.0
    %418 = vmatpush1.msra.mxu0 0.0
    %419 = vmatprep.subr.mxu0 0.0
    %420 = vmatpush1.msra.mxu0 0.0
    %421 = vmatprep.subr.mxu0 0.0
    %422 = vmatpush1.msra.mxu0 0.0
    %423 = vmatprep.subr.mxu0 0.0
    %424 = vmatpush1.msra.mxu0 0.0
    %425 = vmatprep.subr.mxu0 0.0
    %426 = vmatpush1.msra.mxu0 0.0
    %427 = vmatprep.subr.mxu0 0.0
    %428 = vmatpush1.msra.mxu0 0.0
    %429 = vmatprep.subr.mxu0 0.0
    %430 = vmatpush1.msra.mxu0 0.0
    %431 = vmatprep.subr.mxu0 0.0
    %432 = vmatpush1.msra.mxu0 0.0
    %433 = vmatprep.subr.mxu0 0.0
    %434 = vmatpush1.msra.mxu0 0.0
    %435 = vmatprep.subr.mxu0 0.0
    %436 = vmatpush1.msra.mxu0 0.0
    %437 = vmatprep.subr.mxu0 0.0
    %438 = vmatpush1.msra.mxu0 0.0
    %439 = vmatprep.subr.mxu0 0.0
    %440 = vmatpush1.msra.mxu0 0.0
    %441 = vmatprep.subr.mxu0 0.0
    %442 = vmatpush1.msra.mxu0 0.0
    %443 = vmatprep.subr.mxu0 0.0
    %444 = vmatpush1.msra.mxu0 0.0
    %445 = vmatprep.subr.mxu0 0.0
    %446 = vmatpush1.msra.mxu0 0.0
    %447 = vmatprep.subr.mxu0 0.0
    %448 = vmatpush1.msra.mxu0 0.0
    %449 = vmatprep.subr.mxu0 0.0
    %450 = vmatpush1.msra.mxu0 0.0
    %451 = vmatprep.subr.mxu0 0.0
    %452 = vmatpush1.msra.mxu0 0.0
    %453 = vmatprep.mubr.f32.mxu0 0.0
    %454 = vmatmul.mubr.f32.gmra.mrb[0].mxu0 %v387
    %v455 = vpop.f32.mrb[0].mxu0
    %v456 = vadd.f32 %v383, %v455
    %v457 = vpop.f32.mrb[0].mxu0
    %458 = vdwg.mxu0
    %s459 = scalar_lea.vmem %s5, 16
    %v460 = vld [vmem:[%s459] sm:$0xff]
    %v462 = vsel %vm312, %v460, 0
    %464 = vmatprep.subr.mxu0 0.0
    %465 = vmatpush1.msra.mxu0 %v308
    %466 = vmatprep.subr.mxu0 0.0
    %467 = vmatpush1.msra.mxu0 0.0
    %468 = vmatprep.subr.mxu0 0.0
    %469 = vmatpush1.msra.mxu0 0.0
    %470 = vmatprep.subr.mxu0 0.0
    %471 = vmatpush1.msra.mxu0 0.0
    %472 = vmatprep.subr.mxu0 0.0
    %473 = vmatpush1.msra.mxu0 0.0
    %474 = vmatprep.subr.mxu0 0.0
    %475 = vmatpush1.msra.mxu0 0.0
    %476 = vmatprep.subr.mxu0 0.0
    %477 = vmatpush1.msra.mxu0 0.0
    %478 = vmatprep.subr.mxu0 0.0
    %479 = vmatpush1.msra.mxu0 0.0
    %480 = vmatprep.subr.mxu0 0.0
    %481 = vmatpush1.msra.mxu0 0.0
    %482 = vmatprep.subr.mxu0 0.0
    %483 = vmatpush1.msra.mxu0 0.0
    %484 = vmatprep.subr.mxu0 0.0
    %485 = vmatpush1.msra.mxu0 0.0
    %486 = vmatprep.subr.mxu0 0.0
    %487 = vmatpush1.msra.mxu0 0.0
    %488 = vmatprep.subr.mxu0 0.0
    %489 = vmatpush1.msra.mxu0 0.0
    %490 = vmatprep.subr.mxu0 0.0
    %491 = vmatpush1.msra.mxu0 0.0
    %492 = vmatprep.subr.mxu0 0.0
    %493 = vmatpush1.msra.mxu0 0.0
    %494 = vmatprep.subr.mxu0 0.0
    %495 = vmatpush1.msra.mxu0 0.0
    %496 = vmatprep.subr.mxu0 0.0
    %497 = vmatpush1.msra.mxu0 0.0
    %498 = vmatprep.subr.mxu0 0.0
    %499 = vmatpush1.msra.mxu0 0.0
    %500 = vmatprep.subr.mxu0 0.0
    %501 = vmatpush1.msra.mxu0 0.0
    %502 = vmatprep.subr.mxu0 0.0
    %503 = vmatpush1.msra.mxu0 0.0
    %504 = vmatprep.subr.mxu0 0.0
    %505 = vmatpush1.msra.mxu0 0.0
    %506 = vmatprep.subr.mxu0 0.0
    %507 = vmatpush1.msra.mxu0 0.0
    %508 = vmatprep.subr.mxu0 0.0
    %509 = vmatpush1.msra.mxu0 0.0
    %510 = vmatprep.subr.mxu0 0.0
    %511 = vmatpush1.msra.mxu0 0.0
    %512 = vmatprep.subr.mxu0 0.0
    %513 = vmatpush1.msra.mxu0 0.0
    %514 = vmatprep.subr.mxu0 0.0
    %515 = vmatpush1.msra.mxu0 0.0
    %516 = vmatprep.subr.mxu0 0.0
    %517 = vmatpush1.msra.mxu0 0.0
    %518 = vmatprep.subr.mxu0 0.0
    %519 = vmatpush1.msra.mxu0 0.0
    %520 = vmatprep.subr.mxu0 0.0
    %521 = vmatpush1.msra.mxu0 0.0
    %522 = vmatprep.subr.mxu0 0.0
    %523 = vmatpush1.msra.mxu0 0.0
    %524 = vmatprep.subr.mxu0 0.0
    %525 = vmatpush1.msra.mxu0 0.0
    %526 = vmatprep.subr.mxu0 0.0
    %527 = vmatpush1.msra.mxu0 0.0
    %528 = vmatprep.mubr.f32.mxu0 0.0
    %529 = vmatmul.mubr.f32.gmra.mrb[0].mxu0 %v462
    %v530 = vpop.f32.mrb[0].mxu0
    %v531 = vadd.f32 0.0, %v530
    %v532 = vpop.f32.mrb[0].mxu0
    %533 = vdwg.mxu0
    %v534 = vadd.f32 %v456, %v531
    %v535 = vld [vmem:[%s6] sm:$0xff]
    %537 = vset.pattern.permute.xlu0 0
    %538 = vperm.xlu0 %537, %v535
    %v539 = vpop.permute.xlu0 %538
    %v541 = vadd.f32 %v534, %v539
    %vm542 = vcmp.gt.f32.partialorder %v541, 0.0
    %v543 = vmin.f32 %v541, 0.0
    %v544 = vmul.f32 %v543, 1.442695
    %v545 = vpow.pop %v544
    %v546 = vsub.f32 %v545, 1.0
    %v547 = vsel %vm542, %v541, %v546
    %548 = vrot.lane.b32.xlu0 %v547, 1
    %v549 = vpop.permute.xlu0 %548
    %v550 = vmul.f32 %v549, %v42
    %551 = vrot.lane.b32.xlu0 %v547, 127
    %v552 = vpop.permute.xlu0 %551
    %v553 = vmul.f32 %v552, %v51
    %s554 = scalar_lea.vmem %s7, 4
    %v555 = vld [vmem:[%s554] sm:$0xf]
    %v556 = vld [vmem:[%s7] sm:$0xf]
    %v558 = vsel %vm312, %v556, 0
    %560 = vmatprep.subr.mxu0 0.0
    %561 = vmatpush1.msra.mxu0 %v550
    %562 = vmatprep.subr.mxu0 0.0
    %563 = vmatpush1.msra.mxu0 0.0
    %564 = vmatprep.subr.mxu0 0.0
    %565 = vmatpush1.msra.mxu0 0.0
    %566 = vmatprep.subr.mxu0 0.0
    %567 = vmatpush1.msra.mxu0 0.0
    %568 = vmatprep.subr.mxu0 0.0
    %569 = vmatpush1.msra.mxu0 0.0
    %570 = vmatprep.subr.mxu0 0.0
    %571 = vmatpush1.msra.mxu0 0.0
    %572 = vmatprep.subr.mxu0 0.0
    %573 = vmatpush1.msra.mxu0 0.0
    %574 = vmatprep.subr.mxu0 0.0
    %575 = vmatpush1.msra.mxu0 0.0
    %576 = vmatprep.subr.mxu0 0.0
    %577 = vmatpush1.msra.mxu0 0.0
    %578 = vmatprep.subr.mxu0 0.0
    %579 = vmatpush1.msra.mxu0 0.0
    %580 = vmatprep.subr.mxu0 0.0
    %581 = vmatpush1.msra.mxu0 0.0
    %582 = vmatprep.subr.mxu0 0.0
    %583 = vmatpush1.msra.mxu0 0.0
    %584 = vmatprep.subr.mxu0 0.0
    %585 = vmatpush1.msra.mxu0 0.0
    %586 = vmatprep.subr.mxu0 0.0
    %587 = vmatpush1.msra.mxu0 0.0
    %588 = vmatprep.subr.mxu0 0.0
    %589 = vmatpush1.msra.mxu0 0.0
    %590 = vmatprep.subr.mxu0 0.0
    %591 = vmatpush1.msra.mxu0 0.0
    %592 = vmatprep.subr.mxu0 0.0
    %593 = vmatpush1.msra.mxu0 0.0
    %594 = vmatprep.subr.mxu0 0.0
    %595 = vmatpush1.msra.mxu0 0.0
    %596 = vmatprep.subr.mxu0 0.0
    %597 = vmatpush1.msra.mxu0 0.0
    %598 = vmatprep.subr.mxu0 0.0
    %599 = vmatpush1.msra.mxu0 0.0
    %600 = vmatprep.subr.mxu0 0.0
    %601 = vmatpush1.msra.mxu0 0.0
    %602 = vmatprep.subr.mxu0 0.0
    %603 = vmatpush1.msra.mxu0 0.0
    %604 = vmatprep.subr.mxu0 0.0
    %605 = vmatpush1.msra.mxu0 0.0
    %606 = vmatprep.subr.mxu0 0.0
    %607 = vmatpush1.msra.mxu0 0.0
    %608 = vmatprep.subr.mxu0 0.0
    %609 = vmatpush1.msra.mxu0 0.0
    %610 = vmatprep.subr.mxu0 0.0
    %611 = vmatpush1.msra.mxu0 0.0
    %612 = vmatprep.subr.mxu0 0.0
    %613 = vmatpush1.msra.mxu0 0.0
    %614 = vmatprep.subr.mxu0 0.0
    %615 = vmatpush1.msra.mxu0 0.0
    %616 = vmatprep.subr.mxu0 0.0
    %617 = vmatpush1.msra.mxu0 0.0
    %618 = vmatprep.subr.mxu0 0.0
    %619 = vmatpush1.msra.mxu0 0.0
    %620 = vmatprep.subr.mxu0 0.0
    %621 = vmatpush1.msra.mxu0 0.0
    %622 = vmatprep.subr.mxu0 0.0
    %623 = vmatpush1.msra.mxu0 0.0
    %624 = vmatprep.mubr.f32.mxu0 0.0
    %625 = vmatmul.mubr.f32.gmra.mrb[0].mxu0 %v558
    %v626 = vpop.f32.mrb[0].mxu0
    %v627 = vadd.f32 0.0, %v626
    %v628 = vpop.f32.mrb[0].mxu0
    %629 = vdwg.mxu0
    %v631 = vsel %vm312, %v555, 0
    %633 = vmatprep.subr.mxu0 0.0
    %634 = vmatpush1.msra.mxu0 %v547
    %635 = vmatprep.subr.mxu0 0.0
    %636 = vmatpush1.msra.mxu0 0.0
    %637 = vmatprep.subr.mxu0 0.0
    %638 = vmatpush1.msra.mxu0 0.0
    %639 = vmatprep.subr.mxu0 0.0
    %640 = vmatpush1.msra.mxu0 0.0
    %641 = vmatprep.subr.mxu0 0.0
    %642 = vmatpush1.msra.mxu0 0.0
    %643 = vmatprep.subr.mxu0 0.0
    %644 = vmatpush1.msra.mxu0 0.0
    %645 = vmatprep.subr.mxu0 0.0
    %646 = vmatpush1.msra.mxu0 0.0
    %647 = vmatprep.subr.mxu0 0.0
    %648 = vmatpush1.msra.mxu0 0.0
    %649 = vmatprep.subr.mxu0 0.0
    %650 = vmatpush1.msra.mxu0 0.0
    %651 = vmatprep.subr.mxu0 0.0
    %652 = vmatpush1.msra.mxu0 0.0
    %653 = vmatprep.subr.mxu0 0.0
    %654 = vmatpush1.msra.mxu0 0.0
    %655 = vmatprep.subr.mxu0 0.0
    %656 = vmatpush1.msra.mxu0 0.0
    %657 = vmatprep.subr.mxu0 0.0
    %658 = vmatpush1.msra.mxu0 0.0
    %659 = vmatprep.subr.mxu0 0.0
    %660 = vmatpush1.msra.mxu0 0.0
    %661 = vmatprep.subr.mxu0 0.0
    %662 = vmatpush1.msra.mxu0 0.0
    %663 = vmatprep.subr.mxu0 0.0
    %664 = vmatpush1.msra.mxu0 0.0
    %665 = vmatprep.subr.mxu0 0.0
    %666 = vmatpush1.msra.mxu0 0.0
    %667 = vmatprep.subr.mxu0 0.0
    %668 = vmatpush1.msra.mxu0 0.0
    %669 = vmatprep.subr.mxu0 0.0
    %670 = vmatpush1.msra.mxu0 0.0
    %671 = vmatprep.subr.mxu0 0.0
    %672 = vmatpush1.msra.mxu0 0.0
    %673 = vmatprep.subr.mxu0 0.0
    %674 = vmatpush1.msra.mxu0 0.0
    %675 = vmatprep.subr.mxu0 0.0
    %676 = vmatpush1.msra.mxu0 0.0
    %677 = vmatprep.subr.mxu0 0.0
    %678 = vmatpush1.msra.mxu0 0.0
    %679 = vmatprep.subr.mxu0 0.0
    %680 = vmatpush1.msra.mxu0 0.0
    %681 = vmatprep.subr.mxu0 0.0
    %682 = vmatpush1.msra.mxu0 0.0
    %683 = vmatprep.subr.mxu0 0.0
    %684 = vmatpush1.msra.mxu0 0.0
    %685 = vmatprep.subr.mxu0 0.0
    %686 = vmatpush1.msra.mxu0 0.0
    %687 = vmatprep.subr.mxu0 0.0
    %688 = vmatpush1.msra.mxu0 0.0
    %689 = vmatprep.subr.mxu0 0.0
    %690 = vmatpush1.msra.mxu0 0.0
    %691 = vmatprep.subr.mxu0 0.0
    %692 = vmatpush1.msra.mxu0 0.0
    %693 = vmatprep.subr.mxu0 0.0
    %694 = vmatpush1.msra.mxu0 0.0
    %695 = vmatprep.subr.mxu0 0.0
    %696 = vmatpush1.msra.mxu0 0.0
    %697 = vmatprep.mubr.f32.mxu0 0.0
    %698 = vmatmul.mubr.f32.gmra.mrb[0].mxu0 %v631
    %v699 = vpop.f32.mrb[0].mxu0
    %v700 = vadd.f32 %v627, %v699
    %v701 = vpop.f32.mrb[0].mxu0
    %702 = vdwg.mxu0
    %s703 = scalar_lea.vmem %s7, 8
    %v704 = vld [vmem:[%s703] sm:$0xf]
    %v706 = vsel %vm312, %v704, 0
    %708 = vmatprep.subr.mxu0 0.0
    %709 = vmatpush1.msra.mxu0 %v553
    %710 = vmatprep.subr.mxu0 0.0
    %711 = vmatpush1.msra.mxu0 0.0
    %712 = vmatprep.subr.mxu0 0.0
    %713 = vmatpush1.msra.mxu0 0.0
    %714 = vmatprep.subr.mxu0 0.0
    %715 = vmatpush1.msra.mxu0 0.0
    %716 = vmatprep.subr.mxu0 0.0
    %717 = vmatpush1.msra.mxu0 0.0
    %718 = vmatprep.subr.mxu0 0.0
    %719 = vmatpush1.msra.mxu0 0.0
    %720 = vmatprep.subr.mxu0 0.0
    %721 = vmatpush1.msra.mxu0 0.0
    %722 = vmatprep.subr.mxu0 0.0
    %723 = vmatpush1.msra.mxu0 0.0
    %724 = vmatprep.subr.mxu0 0.0
    %725 = vmatpush1.msra.mxu0 0.0
    %726 = vmatprep.subr.mxu0 0.0
    %727 = vmatpush1.msra.mxu0 0.0
    %728 = vmatprep.subr.mxu0 0.0
    %729 = vmatpush1.msra.mxu0 0.0
    %730 = vmatprep.subr.mxu0 0.0
    %731 = vmatpush1.msra.mxu0 0.0
    %732 = vmatprep.subr.mxu0 0.0
    %733 = vmatpush1.msra.mxu0 0.0
    %734 = vmatprep.subr.mxu0 0.0
    %735 = vmatpush1.msra.mxu0 0.0
    %736 = vmatprep.subr.mxu0 0.0
    %737 = vmatpush1.msra.mxu0 0.0
    %738 = vmatprep.subr.mxu0 0.0
    %739 = vmatpush1.msra.mxu0 0.0
    %740 = vmatprep.subr.mxu0 0.0
    %741 = vmatpush1.msra.mxu0 0.0
    %742 = vmatprep.subr.mxu0 0.0
    %743 = vmatpush1.msra.mxu0 0.0
    %744 = vmatprep.subr.mxu0 0.0
    %745 = vmatpush1.msra.mxu0 0.0
    %746 = vmatprep.subr.mxu0 0.0
    %747 = vmatpush1.msra.mxu0 0.0
    %748 = vmatprep.subr.mxu0 0.0
    %749 = vmatpush1.msra.mxu0 0.0
    %750 = vmatprep.subr.mxu0 0.0
    %751 = vmatpush1.msra.mxu0 0.0
    %752 = vmatprep.subr.mxu0 0.0
    %753 = vmatpush1.msra.mxu0 0.0
    %754 = vmatprep.subr.mxu0 0.0
    %755 = vmatpush1.msra.mxu0 0.0
    %756 = vmatprep.subr.mxu0 0.0
    %757 = vmatpush1.msra.mxu0 0.0
    %758 = vmatprep.subr.mxu0 0.0
    %759 = vmatpush1.msra.mxu0 0.0
    %760 = vmatprep.subr.mxu0 0.0
    %761 = vmatpush1.msra.mxu0 0.0
    %762 = vmatprep.subr.mxu0 0.0
    %763 = vmatpush1.msra.mxu0 0.0
    %764 = vmatprep.subr.mxu0 0.0
    %765 = vmatpush1.msra.mxu0 0.0
    %766 = vmatprep.subr.mxu0 0.0
    %767 = vmatpush1.msra.mxu0 0.0
    %768 = vmatprep.subr.mxu0 0.0
    %769 = vmatpush1.msra.mxu0 0.0
    %770 = vmatprep.subr.mxu0 0.0
    %771 = vmatpush1.msra.mxu0 0.0
    %772 = vmatprep.mubr.f32.mxu0 0.0
    %773 = vmatmul.mubr.f32.gmra.mrb[0].mxu0 %v706
    %v774 = vpop.f32.mrb[0].mxu0
    %v775 = vadd.f32 0.0, %v774
    %v776 = vpop.f32.mrb[0].mxu0
    %777 = vdwg.mxu0
    %v778 = vadd.f32 %v700, %v775
    %v779 = vld [vmem:[%s8] sm:$0xf]
    %781 = vset.pattern.permute.xlu0 0
    %782 = vperm.xlu0 %781, %v779
    %v783 = vpop.permute.xlu0 %782
    %v785 = vadd.f32 %v778, %v783
    %v786 = vadd.f32 %v785, %v33
    %787 = vst [vmem:[#allocation2] sm:$0xf] %v786
    // Predicated region
    $region38: #{tpu_custom_call.1} parent=1 // pred_check
      _
    $region39: #{tpu_custom_call.1} parent=1 // pred_check_branch
      %789 = sbr.rel (0) target = $region41
    $region40: #{tpu_custom_call.1} parent=1 // pred_region
      %s791 = ssub.s32 64, 64
      %792 = vsyncadd [#allocation3], %s791
      %s794 = sshll.u32 [#allocation2], 4
      %s795 = int_to_ptr.vmem [resolvable:$true] %s794
      %797 = dma.vmem_to_hbm [thread:$0]  %s795, 64, %s9, [#allocation3]
    $region41: #{tpu_custom_call.1} parent=1 // pred_fallthru
      _
    // Predicated region
    $region42: #{tpu_custom_call.1} parent=1 // pred_check
      _
    $region43: #{tpu_custom_call.1} parent=1 // pred_check_branch
      %799 = sbr.rel (0) target = $region45
    $region44: #{tpu_custom_call.1} parent=1 // pred_region
      %800 = dma.done [#allocation3], 64
    $region45: #{tpu_custom_call.1} parent=1 // pred_fallthru
      _
    %801 = vsyncpa [#allocation3], 1

</llo_original>
